<compile_context>
chip_gen: v5e
topology: v5e:2x2
jax: 0.10.0
libtpu: 0.0.40
codegen_flags: <defaults>
</compile_context>

<pallas_src>
import jax
import jax.numpy as jnp
from jax.experimental import pallas as pl
from jax.experimental.pallas import tpu as pltpu

_LANE = 128
_MIB = 1 << 20


def _round_up(v, m):
    return -(-v // m) * m


# ---------------------------------------------------------------------------
# Kernels
# ---------------------------------------------------------------------------

def _make_resident_kernel(n, hp, compute_dtype):
    """All-layer weights VMEM-resident; one grid step = one batch tile through
    every layer."""

    def kernel(x_ref, w_ref, b_ref, o_ref):
        # x_ref: (TB, hp); w_ref: (n, hp, 2hp); b_ref: (n, 1, 2hp) f32; o_ref: (TB, hp)
        def layer(i, xv):
            w = w_ref[i]                                          # (hp, 2hp)
            xm = xv if xv.dtype == w.dtype else xv.astype(w.dtype)
            # Fused [linear | gate] matmul; MXU accumulates in f32.
            y = jnp.dot(xm, w, preferred_element_type=jnp.float32)
            y = y + b_ref[i]                                      # f32 bias add
            yc = y.astype(compute_dtype)
            nonlinear = jnp.maximum(yc[:, :hp], 0.0)              # relu branch
            gate = jax.nn.sigmoid(yc[:, hp:])                     # gate branch
            # gate*nl + (1-gate)*x  ==  x + gate*(nl - x)
            return xv + gate * (nonlinear - xv)

        xv = x_ref[...].astype(compute_dtype)
        if n <= 8:
            for i in range(n):                                    # fully unrolled
                xv = layer(i, xv)
        else:
            # Deep stacks: keep the loop visible / bound vreg live ranges.
            xv = jax.lax.fori_loop(0, n, layer, xv, unroll=True)
        o_ref[...] = xv.astype(o_ref.dtype)

    return kernel


def _make_stream_kernel(hp, compute_dtype):
    """One layer's weights per grid step (trailing 'arbitrary' layer axis); the
    running activation lives in a VMEM scratch accumulator."""

    def kernel(x_ref, w_ref, b_ref, o_ref, xv_ref):
        l = pl.program_id(1)

        @pl.when(l == 0)
        def _():
            xv_ref[...] = x_ref[...].astype(compute_dtype)

        xv = xv_ref[...]
        w = w_ref[0]                                              # (hp, 2hp)
        xm = xv if xv.dtype == w.dtype else xv.astype(w.dtype)
        y = jnp.dot(xm, w, preferred_element_type=jnp.float32)
        y = y + b_ref[0]                                          # f32 bias add
        yc = y.astype(compute_dtype)
        nonlinear = jnp.maximum(yc[:, :hp], 0.0)
        gate = jax.nn.sigmoid(yc[:, hp:])
        xv_ref[...] = xv + gate * (nonlinear - xv)

        @pl.when(l == pl.num_programs(1) - 1)
        def _():
            o_ref[...] = xv_ref[...].astype(o_ref.dtype)

    return kernel


# ---------------------------------------------------------------------------
# Wrapper
# ---------------------------------------------------------------------------

def highway(x, w_lin, b_lin, w_gate, b_gate, *,
            use_bf16_matmul=False,
            bf16_postops=None,
            batch_tile=512,
            max_resident_weight_bytes=24 * _MIB):
    """Highway forward. x: (B, H); w_*: (n, H, H) laid out so y = x @ W + b
    (i.e. torch weight.T); b_*: (n, H). Returns (B, H) in x.dtype."""
    B, H = x.shape
    n = w_lin.shape[0]
    out_dtype = x.dtype

    # ---- lane alignment: pad hidden to a multiple of 128 -------------------
    hp = _round_up(H, _LANE)
    pad = hp - H
    if pad:
        # Exact: padded input channels are 0 and padded weight rows/cols are 0,
        # so padded activations stay 0 through every highway blend.
        x = jnp.pad(x, ((0, 0), (0, pad)))
        w_lin = jnp.pad(w_lin, ((0, 0), (0, pad), (0, pad)))
        w_gate = jnp.pad(w_gate, ((0, 0), (0, pad), (0, pad)))
        b_lin = jnp.pad(b_lin, ((0, 0), (0, pad)))
        b_gate = jnp.pad(b_gate, ((0, 0), (0, pad)))

    # ---- fuse the two branches into one (hp, 2hp) matmul per layer ---------
    wcat = jnp.concatenate([w_lin, w_gate], axis=-1)              # (n, hp, 2hp)
    bcat = jnp.concatenate([b_lin, b_gate], axis=-1).reshape(n, 1, 2 * hp)
    bcat = bcat.astype(jnp.float32)
    if use_bf16_matmul:
        # Halves weight HBM->VMEM bytes; MXU accumulation stays f32.
        wcat = wcat.astype(jnp.bfloat16)
    if bf16_postops is None:
        bf16_postops = use_bf16_matmul          # set False on v5e (no bf16 VPU/EUP)
    compute_dtype = jnp.bfloat16 if (use_bf16_matmul and bf16_postops) else jnp.float32

    # ---- batch tiling -------------------------------------------------------
    if B >= 256:
        # >= 2 tiles so megacore / v7x's second TensorCore always has work and the
        # batch stream stays pipelined; partial last tile is masked by Pallas.
        tb = min(batch_tile, max(128, _round_up((B + 1) // 2, 8)))
        grid_b = pl.cdiv(B, tb)
    else:
        tb = B                                   # single block == full array dims
        grid_b = 1

    # ---- resident vs. layer-streaming weights; explicit VMEM budget --------
    w_item = jnp.dtype(wcat.dtype).itemsize
    x_item = jnp.dtype(x.dtype).itemsize
    o_item = jnp.dtype(out_dtype).itemsize
    c_item = jnp.dtype(compute_dtype).itemsize
    # Conservative: assume the constant-index weight block is double-buffered.
    resident_w_bytes = 2 * n * hp * 2 * hp * w_item
    streaming = resident_w_bytes > max_resident_weight_bytes

    act_bytes = 2 * tb * hp * x_item + 2 * tb * hp * o_item       # in/out tiles
    if streaming:
        vmem_est = (act_bytes + 2 * (hp * 2 * hp * w_item) + 2 * (2 * hp * 4)
                    + tb * hp * c_item)
    else:
        vmem_est = act_bytes + resident_w_bytes + 2 * n * 2 * hp * 4
    vmem_limit = int(min(max(vmem_est + 8 * _MIB, 32 * _MIB), 100 * _MIB))

    if streaming:
        # TODO(synk): for hp >~ 1536 (f32) also tile the 2*hp weight output dim so
        # one layer's double-buffered weights fit v7x's 64 MiB VMEM.
        kernel = _make_stream_kernel(hp, compute_dtype)
        grid = (grid_b, n)
        in_specs = [
            pl.BlockSpec((tb, hp), lambda i, l: (i, 0)),            # x batch tile
            pl.BlockSpec((1, hp, 2 * hp), lambda i, l: (l, 0, 0)),  # layer weights
            pl.BlockSpec((1, 1, 2 * hp), lambda i, l: (l, 0, 0)),   # layer bias
        ]
        out_specs = pl.BlockSpec((tb, hp), lambda i, l: (i, 0))
        scratch_shapes = [pltpu.VMEM((tb, hp), compute_dtype)]
        dim_sem = ("parallel", "arbitrary")
    else:
        kernel = _make_resident_kernel(n, hp, compute_dtype)
        grid = (grid_b,)
        in_specs = [
            pl.BlockSpec((tb, hp), lambda i: (i, 0)),               # x batch tile
            pl.BlockSpec((n, hp, 2 * hp), lambda i: (0, 0, 0)),     # all weights
            pl.BlockSpec((n, 1, 2 * hp), lambda i: (0, 0, 0)),      # all biases
        ]
        out_specs = pl.BlockSpec((tb, hp), lambda i: (i, 0))
        scratch_shapes = []
        dim_sem = ("parallel",)

    out = pl.pallas_call(
        kernel,
        out_shape=jax.ShapeDtypeStruct((B, hp), out_dtype),
        grid_spec=pltpu.PrefetchScalarGridSpec(
            num_scalar_prefetch=0,
            grid=grid,
            in_specs=in_specs,
            out_specs=out_specs,
            scratch_shapes=scratch_shapes,
        ),
        compiler_params=pltpu.CompilerParams(
            dimension_semantics=dim_sem,
            vmem_limit_bytes=vmem_limit,
        ),
    )(x, wcat, bcat)

    return out[:, :H] if pad else out


def highway_ref(x, w_lin, b_lin, w_gate, b_gate):
    """Pure-JAX reference matching the PyTorch forward."""
    n = w_lin.shape[0]
    x = x.astype(jnp.float32)
    for i in range(n):
        gate = jax.nn.sigmoid(x @ w_gate[i] + b_gate[i])
        nonlinear = jnp.maximum(x @ w_lin[i] + b_lin[i], 0.0)
        x = gate * nonlinear + (1.0 - gate) * x
    return x


if __name__ == "__main__":
    def make_inputs(key, n, H, B):
        kx, kwl, kbl, kwg, kbg = jax.random.split(key, 5)
        bound = 1.0 / jnp.sqrt(H)           # mimic nn.Linear default init scale
        x = jax.random.normal(kx, (B, H), dtype=jnp.float32)
        w_lin = jax.random.uniform(kwl, (n, H, H), minval=-bound, maxval=bound,
                                   dtype=jnp.float32)
        b_lin = jax.random.uniform(kbl, (n, H), minval=-bound, maxval=bound,
                                   dtype=jnp.float32)
        w_gate = jax.random.uniform(kwg, (n, H, H), minval=-bound, maxval=bound,
                                    dtype=jnp.float32)
        b_gate = jax.random.uniform(kbg, (n, H), minval=-bound, maxval=bound,
                                    dtype=jnp.float32)
        return x, w_lin, b_lin, w_gate, b_gate

    # 1) Base case (module default-ish): layer_num=2, hidden=128, batch=8 (resident f32).
    args = make_inputs(jax.random.PRNGKey(0), 2, 128, 8)
    ref = highway_ref(*args)
    out = jax.block_until_ready(highway(*args))
    assert jnp.allclose(out, ref, atol=1e-5, rtol=1e-5), "f32 resident mismatch"

    # 2) bf16 weights + bf16 post-ops (bandwidth / VPU-EUP optimized path).
    out_bf16 = jax.block_until_ready(highway(*args, use_bf16_matmul=True))
    assert jnp.allclose(out_bf16, ref, atol=1e-1, rtol=1e-1), "bf16 mismatch"

    # 3) Layer-streaming path (forced), f32.
    out_s = jax.block_until_ready(highway(*args, max_resident_weight_bytes=0))
    assert jnp.allclose(out_s, ref, atol=1e-5, rtol=1e-5), "f32 streaming mismatch"

    # 4) Non-lane-aligned hidden size (padding path), f32.
    args_pad = make_inputs(jax.random.PRNGKey(1), 2, 100, 8)
    ref_pad = highway_ref(*args_pad)
    out_pad = jax.block_until_ready(highway(*args_pad))
    assert jnp.allclose(out_pad, ref_pad, atol=1e-5, rtol=1e-5), "padded-H mismatch"

    # 5) Larger batch: cdiv grid, >=2 tiles, masked partial last tile.
    args_big = make_inputs(jax.random.PRNGKey(2), 2, 128, 300)
    ref_big = highway_ref(*args_big)
    out_big = jax.block_until_ready(highway(*args_big))
    assert jnp.allclose(out_big, ref_big, atol=1e-5, rtol=1e-5), "large-batch mismatch"
    out_big_s = jax.block_until_ready(highway(*args_big, max_resident_weight_bytes=0))
    assert jnp.allclose(out_big_s, ref_big, atol=1e-5, rtol=1e-5), \
        "large-batch streaming mismatch"

    # 6) Deep stack (n > 8): fori_loop layer loop.
    args_deep = make_inputs(jax.random.PRNGKey(3), 10, 128, 8)
    ref_deep = highway_ref(*args_deep)
    out_deep = jax.block_until_ready(highway(*args_deep))
    assert jnp.allclose(out_deep, ref_deep, atol=1e-4, rtol=1e-4), "deep-stack mismatch"

    print("KERNEL_OK")
</pallas_src>

<mosaic_0001>
module attributes {stable_mosaic.version = 11 : i64} {
  func.func @kernel(%arg0: i32, %arg1: memref<8x128xf32, #tpu.memory_space<vmem>>, %arg2: memref<2x128x256xf32, #tpu.memory_space<vmem>>, %arg3: memref<2x1x256xf32, #tpu.memory_space<vmem>>, %arg4: memref<8x128xf32, #tpu.memory_space<vmem>>) attributes {dimension_semantics = [#tpu.dimension_semantics<parallel>], iteration_bounds = array<i64: 1>, scalar_prefetch = 0 : i64, scratch_operands = 0 : i64, tpu.core_type = #tpu.core_type<tc>, window_params = [{transform_indices = @transform_0, window_bounds = array<i64: 8, 128>}, {pipeline_mode = #tpu.pipeline_mode<synchronous>, transform_indices = @transform_1, window_bounds = array<i64: 2, 128, 256>}, {pipeline_mode = #tpu.pipeline_mode<synchronous>, transform_indices = @transform_2, window_bounds = array<i64: 2, 1, 256>}, {transform_indices = @transform_3, window_bounds = array<i64: 8, 128>}]} {
    %c0 = arith.constant 0 : index
    %c0_0 = arith.constant 0 : index
    %0 = vector.load %arg1[%c0, %c0_0] : memref<8x128xf32, #tpu.memory_space<vmem>>, vector<8x128xf32>
    %c0_1 = arith.constant 0 : index
    %c0_2 = arith.constant 0 : index
    %c0_3 = arith.constant 0 : index
    %1 = vector.load %arg2[%c0_1, %c0_2, %c0_3] : memref<2x128x256xf32, #tpu.memory_space<vmem>>, vector<1x128x256xf32>
    %2 = vector.shape_cast %1 : vector<1x128x256xf32> to vector<128x256xf32>
    %cst = arith.constant dense<0.000000e+00> : vector<8x256xf32>
    %3 = tpu.matmul %0, %2, %cst {dimension_numbers = #tpu.dot_dimension_numbers<[1], [0], [0], [1], [0, 0, 1, 1], [], []>} : vector<8x128xf32>, vector<128x256xf32>, vector<8x256xf32> -> vector<8x256xf32>
    %c0_4 = arith.constant 0 : index
    %c0_5 = arith.constant 0 : index
    %c0_6 = arith.constant 0 : index
    %4 = vector.load %arg3[%c0_4, %c0_5, %c0_6] : memref<2x1x256xf32, #tpu.memory_space<vmem>>, vector<1x1x256xf32>
    %5 = vector.shape_cast %4 : vector<1x1x256xf32> to vector<1x256xf32>
    %6 = vector.broadcast %5 : vector<1x256xf32> to vector<8x256xf32>
    %7 = arith.addf %3, %6 : vector<8x256xf32>
    %8 = vector.extract_strided_slice %7 {offsets = [0, 0], sizes = [8, 128], strides = [1, 1]} : vector<8x256xf32> to vector<8x128xf32>
    %cst_7 = arith.constant 0.000000e+00 : f32
    %9 = vector.broadcast %cst_7 : f32 to vector<8x128xf32>
    %10 = arith.maximumf %8, %9 : vector<8x128xf32>
    %11 = vector.extract_strided_slice %7 {offsets = [0, 128], sizes = [8, 128], strides = [1, 1]} : vector<8x256xf32> to vector<8x128xf32>
    %12 = arith.negf %11 : vector<8x128xf32>
    %13 = math.exp %12 : vector<8x128xf32>
    %cst_8 = arith.constant 1.000000e+00 : f32
    %14 = vector.broadcast %cst_8 : f32 to vector<8x128xf32>
    %15 = arith.addf %14, %13 : vector<8x128xf32>
    %16 = arith.divf %14, %15 : vector<8x128xf32>
    %17 = arith.subf %10, %0 : vector<8x128xf32>
    %18 = arith.mulf %16, %17 : vector<8x128xf32>
    %19 = arith.addf %0, %18 : vector<8x128xf32>
    %c1 = arith.constant 1 : index
    %c0_9 = arith.constant 0 : index
    %c0_10 = arith.constant 0 : index
    %20 = vector.load %arg2[%c1, %c0_9, %c0_10] : memref<2x128x256xf32, #tpu.memory_space<vmem>>, vector<1x128x256xf32>
    %21 = vector.shape_cast %20 : vector<1x128x256xf32> to vector<128x256xf32>
    %cst_11 = arith.constant dense<0.000000e+00> : vector<8x256xf32>
    %22 = tpu.matmul %19, %21, %cst_11 {dimension_numbers = #tpu.dot_dimension_numbers<[1], [0], [0], [1], [0, 0, 1, 1], [], []>} : vector<8x128xf32>, vector<128x256xf32>, vector<8x256xf32> -> vector<8x256xf32>
    %c1_12 = arith.constant 1 : index
    %c0_13 = arith.constant 0 : index
    %c0_14 = arith.constant 0 : index
    %23 = vector.load %arg3[%c1_12, %c0_13, %c0_14] : memref<2x1x256xf32, #tpu.memory_space<vmem>>, vector<1x1x256xf32>
    %24 = vector.shape_cast %23 : vector<1x1x256xf32> to vector<1x256xf32>
    %25 = vector.broadcast %24 : vector<1x256xf32> to vector<8x256xf32>
    %26 = arith.addf %22, %25 : vector<8x256xf32>
    %27 = vector.extract_strided_slice %26 {offsets = [0, 0], sizes = [8, 128], strides = [1, 1]} : vector<8x256xf32> to vector<8x128xf32>
    %cst_15 = arith.constant 0.000000e+00 : f32
    %28 = vector.broadcast %cst_15 : f32 to vector<8x128xf32>
    %29 = arith.maximumf %27, %28 : vector<8x128xf32>
    %30 = vector.extract_strided_slice %26 {offsets = [0, 128], sizes = [8, 128], strides = [1, 1]} : vector<8x256xf32> to vector<8x128xf32>
    %31 = arith.negf %30 : vector<8x128xf32>
    %32 = math.exp %31 : vector<8x128xf32>
    %cst_16 = arith.constant 1.000000e+00 : f32
    %33 = vector.broadcast %cst_16 : f32 to vector<8x128xf32>
    %34 = arith.addf %33, %32 : vector<8x128xf32>
    %35 = arith.divf %33, %34 : vector<8x128xf32>
    %36 = arith.subf %29, %19 : vector<8x128xf32>
    %37 = arith.mulf %35, %36 : vector<8x128xf32>
    %38 = arith.addf %19, %37 : vector<8x128xf32>
    %c0_17 = arith.constant 0 : index
    %c0_18 = arith.constant 0 : index
    %39 = vector.load %arg4[%c0_17, %c0_18] : memref<8x128xf32, #tpu.memory_space<vmem>>, vector<8x128xf32>
    tpu.vector_store %arg4[%c0_17, %c0_18], %38 {strides = array<i32>} : memref<8x128xf32, #tpu.memory_space<vmem>>, vector<8x128xf32>,
    return
  }
  func.func @transform_0(%arg0: i32) -> (i32, i32) {
    %c0_i32 = arith.constant 0 : i32
    %c0_i32_0 = arith.constant 0 : i32
    return %arg0, %c0_i32 : i32, i32
  }
  func.func @transform_1(%arg0: i32) -> (i32, i32, i32) {
    %c0_i32 = arith.constant 0 : i32
    %c0_i32_0 = arith.constant 0 : i32
    %c0_i32_1 = arith.constant 0 : i32
    %c0_i32_2 = arith.constant 0 : i32
    return %c0_i32, %c0_i32_0, %c0_i32_1 : i32, i32, i32
  }
  func.func @transform_2(%arg0: i32) -> (i32, i32, i32) {
    %c0_i32 = arith.constant 0 : i32
    %c0_i32_0 = arith.constant 0 : i32
    %c0_i32_1 = arith.constant 0 : i32
    %c0_i32_2 = arith.constant 0 : i32
    return %c0_i32, %c0_i32_0, %c0_i32_1 : i32, i32, i32
  }
  func.func @transform_3(%arg0: i32) -> (i32, i32) {
    %c0_i32 = arith.constant 0 : i32
    %c0_i32_0 = arith.constant 0 : i32
    return %arg0, %c0_i32 : i32, i32
  }
}

</mosaic_0001>

<llo_original>
// kernel: tpu_custom_call.1
$region0: #{tpu_custom_call.1}
  #allocation0 [shape = 'u32[]', space=smem, size = 0x4, offset = 0x4, fixed_abs, tag = 'smem constant byte address 0x4 - core index']
  #allocation1 [shape = 'u32[72,128]{1,0:T(1,128)}', space=vmem, size = 0x9000, scoped, tag = 'internal scratch']
  %s0 = inlined_call_operand.hbm [shape: f32[8,128], index: 0, kind: input, shape index: {}]
  %s1 = inlined_call_operand.hbm [shape: f32[2,128,256], index: 1, kind: input, shape index: {}]
  %s2 = inlined_call_operand.hbm [shape: f32[2,1,256], index: 2, kind: input, shape index: {}]
  %s3 = inlined_call_operand.hbm [shape: f32[8,128], index: 3, kind: output, shape index: {}]
  %s4 = sld [smem:[#allocation0]]
  $region34: #{tpu_custom_call.1} parent=0
    _
  %s6 = ssub.s32 1, %s4
  %s7 = scalar_select 0, %s6, %s4
  $region1: #{tpu_custom_call.1} parent=0
    #allocation2 [shape = 'u8[4096]{0}', space=vmem, size = 0x1000, scoped, tag = 'input window, operand 0, single buffered']
    #allocation3 [shape = 's32[1]{0}', space=sflag, size = 0x4, scoped, tag = 'scoped memory for tpu_custom_call.1']
    #allocation4 [shape = 's32[1]{0}', space=sflag, size = 0x4, scoped, tag = 'scoped memory for tpu_custom_call.1']
    #allocation5 [shape = 'u8[262144]{0}', space=vmem, size = 0x40000, scoped, tag = 'input window, operand 1, single buffered']
    #allocation6 [shape = 's32[1]{0}', space=sflag, size = 0x4, scoped, tag = 'scoped memory for tpu_custom_call.1']
    #allocation7 [shape = 'u8[2048]{0}', space=vmem, size = 0x800, scoped, tag = 'input window, operand 2, single buffered']
    #allocation8 [shape = 'u8[4096]{0}', space=vmem, size = 0x1000, scoped, tag = 'output window, operand 0, single buffered']
    %8 = vsyncpa [#allocation3], 0
    %9 = vsyncpa [#allocation6], 0
    %10 = vsyncpa [#allocation4], 0
    // Predicated region
    $region2: #{tpu_custom_call.1} parent=1 // pred_check
      _
    $region3: #{tpu_custom_call.1} parent=1 // pred_check_branch
      %12 = sbr.rel (0) target = $region5
    $region4: #{tpu_custom_call.1} parent=1 // pred_region
      %14 = vsyncadd [#allocation3], 0
      %s16 = sshll.u32 %s0, 4
      %s17 = int_to_ptr.hbm [resolvable:$true] %s16
      %s18 = sshll.u32 [#allocation2], 4
      %s19 = int_to_ptr.vmem [resolvable:$true] %s18
      %21 = dma.hbm_to_vmem [thread:$0]  %s17, 128, %s19, [#allocation3]
    $region5: #{tpu_custom_call.1} parent=1 // pred_fallthru
      _
    // Predicated region
    $region6: #{tpu_custom_call.1} parent=1 // pred_check
      _
    $region7: #{tpu_custom_call.1} parent=1 // pred_check_branch
      %23 = sbr.rel (0) target = $region9
    $region8: #{tpu_custom_call.1} parent=1 // pred_region
      %25 = vsyncadd [#allocation6], 0
      %s26 = sshll.u32 %s1, 4
      %s27 = int_to_ptr.hbm [resolvable:$true] %s26
      %s28 = sshll.u32 [#allocation5], 4
      %s29 = int_to_ptr.vmem [resolvable:$true] %s28
      %34 = dma.hbm_to_vmem [thread:$0]  %s27, 8192, %s29, [#allocation6], 256, 256, 16
    $region9: #{tpu_custom_call.1} parent=1 // pred_fallthru
      _
    // Predicated region
    $region10: #{tpu_custom_call.1} parent=1 // pred_check
      _
    $region11: #{tpu_custom_call.1} parent=1 // pred_check_branch
      %36 = sbr.rel (0) target = $region13
    $region12: #{tpu_custom_call.1} parent=1 // pred_region
      %38 = vsyncadd [#allocation6], 0
      %s39 = sshll.u32 %s2, 4
      %s40 = int_to_ptr.hbm [resolvable:$true] %s39
      %s41 = sshll.u32 [#allocation7], 4
      %s42 = int_to_ptr.vmem [resolvable:$true] %s41
      %47 = dma.hbm_to_vmem [thread:$0]  %s40, 64, %s42, [#allocation6], 32, 32, 2
    $region13: #{tpu_custom_call.1} parent=1 // pred_fallthru
      _
    // Predicated region
    $region14: #{tpu_custom_call.1} parent=1 // pred_check
      _
    $region15: #{tpu_custom_call.1} parent=1 // pred_check_branch
      %49 = sbr.rel (0) target = $region17
    $region16: #{tpu_custom_call.1} parent=1 // pred_region
      %51 = dma.done [#allocation3], 128
    $region17: #{tpu_custom_call.1} parent=1 // pred_fallthru
      _
    // Predicated region
    $region18: #{tpu_custom_call.1} parent=1 // pred_check
      _
    $region19: #{tpu_custom_call.1} parent=1 // pred_check_branch
      %53 = sbr.rel (0) target = $region21
    $region20: #{tpu_custom_call.1} parent=1 // pred_region
      %55 = dma.done [#allocation6], 8192
    $region21: #{tpu_custom_call.1} parent=1 // pred_fallthru
      _
    // Predicated region
    $region22: #{tpu_custom_call.1} parent=1 // pred_check
      _
    $region23: #{tpu_custom_call.1} parent=1 // pred_check_branch
      %57 = sbr.rel (0) target = $region25
    $region24: #{tpu_custom_call.1} parent=1 // pred_region
      %59 = dma.done [#allocation6], 64
    $region25: #{tpu_custom_call.1} parent=1 // pred_fallthru
      _
    %v60 = vld [vmem:[#allocation2] sm:$0xff]
    %v61 = vld [vmem:[#allocation5] sm:$0xff]
    %v62 = vld [vmem:[#allocation5 + $0x8] sm:$0xff]
    %v63 = vld [vmem:[#allocation5 + $0x10] sm:$0xff]
    %v64 = vld [vmem:[#allocation5 + $0x18] sm:$0xff]
    %v65 = vld [vmem:[#allocation5 + $0x20] sm:$0xff]
    %v66 = vld [vmem:[#allocation5 + $0x28] sm:$0xff]
    %v67 = vld [vmem:[#allocation5 + $0x30] sm:$0xff]
    %v68 = vld [vmem:[#allocation5 + $0x38] sm:$0xff]
    %v69 = vld [vmem:[#allocation5 + $0x40] sm:$0xff]
    %v70 = vld [vmem:[#allocation5 + $0x48] sm:$0xff]
    %v71 = vld [vmem:[#allocation5 + $0x50] sm:$0xff]
    %v72 = vld [vmem:[#allocation5 + $0x58] sm:$0xff]
    %v73 = vld [vmem:[#allocation5 + $0x60] sm:$0xff]
    %v74 = vld [vmem:[#allocation5 + $0x68] sm:$0xff]
    %v75 = vld [vmem:[#allocation5 + $0x70] sm:$0xff]
    %v76 = vld [vmem:[#allocation5 + $0x78] sm:$0xff]
    %v77 = vld [vmem:[#allocation5 + $0x80] sm:$0xff]
    %v78 = vld [vmem:[#allocation5 + $0x88] sm:$0xff]
    %v79 = vld [vmem:[#allocation5 + $0x90] sm:$0xff]
    %v80 = vld [vmem:[#allocation5 + $0x98] sm:$0xff]
    %v81 = vld [vmem:[#allocation5 + $0xa0] sm:$0xff]
    %v82 = vld [vmem:[#allocation5 + $0xa8] sm:$0xff]
    %v83 = vld [vmem:[#allocation5 + $0xb0] sm:$0xff]
    %v84 = vld [vmem:[#allocation5 + $0xb8] sm:$0xff]
    %v85 = vld [vmem:[#allocation5 + $0xc0] sm:$0xff]
    %v86 = vld [vmem:[#allocation5 + $0xc8] sm:$0xff]
    %v87 = vld [vmem:[#allocation5 + $0xd0] sm:$0xff]
    %v88 = vld [vmem:[#allocation5 + $0xd8] sm:$0xff]
    %v89 = vld [vmem:[#allocation5 + $0xe0] sm:$0xff]
    %v90 = vld [vmem:[#allocation5 + $0xe8] sm:$0xff]
    %v91 = vld [vmem:[#allocation5 + $0xf0] sm:$0xff]
    %v92 = vld [vmem:[#allocation5 + $0xf8] sm:$0xff]
    %v93 = vld [vmem:[#allocation7] sm:$0x3]
    %v95 = vperm.slane %v93, 0
    %v96 = vperm.slane %v93, 1
    %99 = vmatpush.msra.mxu0 %v91
    %100 = vmatpush.msra.mxu0 %v89
    %101 = vmatpush.msra.mxu0 %v87
    %102 = vmatpush.msra.mxu0 %v85
    %103 = vmatpush.msra.mxu0 %v83
    %104 = vmatpush.msra.mxu0 %v81
    %105 = vmatpush.msra.mxu0 %v79
    %106 = vmatpush.msra.mxu0 %v77
    %107 = vmatpush.msra.mxu0 %v75
    %108 = vmatpush.msra.mxu0 %v73
    %109 = vmatpush.msra.mxu0 %v71
    %110 = vmatpush.msra.mxu0 %v69
    %111 = vmatpush.msra.mxu0 %v67
    %112 = vmatpush.msra.mxu0 %v65
    %113 = vmatpush.msra.mxu0 %v63
    %114 = vmatpush.msra.mxu0 %v61
    %115 = vmatmul.f32.gmra.mxu0 %v60
    %v116 = vpop.f32.mrf.mxu0
    %v117 = vadd.f32 %v95, %v116
    %118 = vdwg.mxu0
    %119 = vmatpush.msra.mxu0 %v92
    %120 = vmatpush.msra.mxu0 %v90
    %121 = vmatpush.msra.mxu0 %v88
    %122 = vmatpush.msra.mxu0 %v86
    %123 = vmatpush.msra.mxu0 %v84
    %124 = vmatpush.msra.mxu0 %v82
    %125 = vmatpush.msra.mxu0 %v80
    %126 = vmatpush.msra.mxu0 %v78
    %127 = vmatpush.msra.mxu0 %v76
    %128 = vmatpush.msra.mxu0 %v74
    %129 = vmatpush.msra.mxu0 %v72
    %130 = vmatpush.msra.mxu0 %v70
    %131 = vmatpush.msra.mxu0 %v68
    %132 = vmatpush.msra.mxu0 %v66
    %133 = vmatpush.msra.mxu0 %v64
    %134 = vmatpush.msra.mxu0 %v62
    %135 = vmatmul.f32.gmra.mxu0 %v60
    %v136 = vpop.f32.mrf.mxu0
    %v137 = vadd.f32 %v96, %v136
    %138 = vdwg.mxu0
    %v139 = vmax.f32 %v117, 0.0
    %v140 = vxor.u32 %v137, 2147483648
    %v141 = vmul.f32 %v140, 1.442695
    %v142 = vpow.pop %v141
    %v143 = vadd.f32 %v142, 1.0
    %v144 = vrcp.pop %v143
    %v145 = vmul.f32 %v143, %v144
    %v146 = vsub.f32 1.0, %v145
    %v147 = vmul.f32 %v144, %v146
    %v148 = vadd.f32 %v144, %v147
    %vm149 = vweird.f32 %v143
    %vm150 = vweird.f32 %v144
    %vm151 = vmor %vm149, %vm150
    %v152 = vsel %vm151, %v144, %v148
    %v153 = vand.u32 2147483647, %v143
    %vm154 = vcmp.eq.f32.partialorder %v153, 8.507059e+37
    %v155 = vand.u32 %v143, 2147483648
    %v156 = vor.u32 1.1754944e-38, %v155
    %v157 = vsel %vm154, %v156, %v152
    %v158 = vmul.f32 1.0, %v157
    %v159 = vsub.f32 %v139, %v60
    %v160 = vmul.f32 %v158, %v159
    %v161 = vadd.f32 %v60, %v160
    %s162 = scalar_lea.vmem [#allocation5], 256
    %v163 = vld [vmem:[%s162] sm:$0xff]
    %v164 = vld [vmem:[%s162 + $0x8] sm:$0xff]
    %v165 = vld [vmem:[%s162 + $0x10] sm:$0xff]
    %v166 = vld [vmem:[%s162 + $0x18] sm:$0xff]
    %v167 = vld [vmem:[%s162 + $0x20] sm:$0xff]
    %v168 = vld [vmem:[%s162 + $0x28] sm:$0xff]
    %v169 = vld [vmem:[%s162 + $0x30] sm:$0xff]
    %v170 = vld [vmem:[%s162 + $0x38] sm:$0xff]
    %v171 = vld [vmem:[%s162 + $0x40] sm:$0xff]
    %v172 = vld [vmem:[%s162 + $0x48] sm:$0xff]
    %v173 = vld [vmem:[%s162 + $0x50] sm:$0xff]
    %v174 = vld [vmem:[%s162 + $0x58] sm:$0xff]
    %v175 = vld [vmem:[%s162 + $0x60] sm:$0xff]
    %v176 = vld [vmem:[%s162 + $0x68] sm:$0xff]
    %v177 = vld [vmem:[%s162 + $0x70] sm:$0xff]
    %v178 = vld [vmem:[%s162 + $0x78] sm:$0xff]
    %v179 = vld [vmem:[%s162 + $0x80] sm:$0xff]
    %v180 = vld [vmem:[%s162 + $0x88] sm:$0xff]
    %v181 = vld [vmem:[%s162 + $0x90] sm:$0xff]
    %v182 = vld [vmem:[%s162 + $0x98] sm:$0xff]
    %v183 = vld [vmem:[%s162 + $0xa0] sm:$0xff]
    %v184 = vld [vmem:[%s162 + $0xa8] sm:$0xff]
    %v185 = vld [vmem:[%s162 + $0xb0] sm:$0xff]
    %v186 = vld [vmem:[%s162 + $0xb8] sm:$0xff]
    %v187 = vld [vmem:[%s162 + $0xc0] sm:$0xff]
    %v188 = vld [vmem:[%s162 + $0xc8] sm:$0xff]
    %v189 = vld [vmem:[%s162 + $0xd0] sm:$0xff]
    %v190 = vld [vmem:[%s162 + $0xd8] sm:$0xff]
    %v191 = vld [vmem:[%s162 + $0xe0] sm:$0xff]
    %v192 = vld [vmem:[%s162 + $0xe8] sm:$0xff]
    %v193 = vld [vmem:[%s162 + $0xf0] sm:$0xff]
    %v194 = vld [vmem:[%s162 + $0xf8] sm:$0xff]
    %s195 = scalar_lea.vmem [#allocation7], 2
    %v196 = vld [vmem:[%s195] sm:$0x3]
    %v198 = vperm.slane %v196, 0
    %v199 = vperm.slane %v196, 1
    %202 = vmatpush.msra.mxu0 %v193
    %203 = vmatpush.msra.mxu0 %v191
    %204 = vmatpush.msra.mxu0 %v189
    %205 = vmatpush.msra.mxu0 %v187
    %206 = vmatpush.msra.mxu0 %v185
    %207 = vmatpush.msra.mxu0 %v183
    %208 = vmatpush.msra.mxu0 %v181
    %209 = vmatpush.msra.mxu0 %v179
    %210 = vmatpush.msra.mxu0 %v177
    %211 = vmatpush.msra.mxu0 %v175
    %212 = vmatpush.msra.mxu0 %v173
    %213 = vmatpush.msra.mxu0 %v171
    %214 = vmatpush.msra.mxu0 %v169
    %215 = vmatpush.msra.mxu0 %v167
    %216 = vmatpush.msra.mxu0 %v165
    %217 = vmatpush.msra.mxu0 %v163
    %218 = vmatmul.f32.gmra.mxu0 %v161
    %v219 = vpop.f32.mrf.mxu0
    %v220 = vadd.f32 %v198, %v219
    %221 = vdwg.mxu0
    %222 = vmatpush.msra.mxu0 %v194
    %223 = vmatpush.msra.mxu0 %v192
    %224 = vmatpush.msra.mxu0 %v190
    %225 = vmatpush.msra.mxu0 %v188
    %226 = vmatpush.msra.mxu0 %v186
    %227 = vmatpush.msra.mxu0 %v184
    %228 = vmatpush.msra.mxu0 %v182
    %229 = vmatpush.msra.mxu0 %v180
    %230 = vmatpush.msra.mxu0 %v178
    %231 = vmatpush.msra.mxu0 %v176
    %232 = vmatpush.msra.mxu0 %v174
    %233 = vmatpush.msra.mxu0 %v172
    %234 = vmatpush.msra.mxu0 %v170
    %235 = vmatpush.msra.mxu0 %v168
    %236 = vmatpush.msra.mxu0 %v166
    %237 = vmatpush.msra.mxu0 %v164
    %238 = vmatmul.f32.gmra.mxu0 %v161
    %v239 = vpop.f32.mrf.mxu0
    %v240 = vadd.f32 %v199, %v239
    %241 = vdwg.mxu0
    %v242 = vmax.f32 %v220, 0.0
    %v243 = vxor.u32 %v240, 2147483648
    %v244 = vmul.f32 %v243, 1.442695
    %v245 = vpow.pop %v244
    %v246 = vadd.f32 %v245, 1.0
    %v247 = vrcp.pop %v246
    %v248 = vmul.f32 %v246, %v247
    %v249 = vsub.f32 1.0, %v248
    %v250 = vmul.f32 %v247, %v249
    %v251 = vadd.f32 %v247, %v250
    %vm252 = vweird.f32 %v246
    %vm253 = vweird.f32 %v247
    %vm254 = vmor %vm252, %vm253
    %v255 = vsel %vm254, %v247, %v251
    %v256 = vand.u32 2147483647, %v246
    %vm257 = vcmp.eq.f32.partialorder %v256, 8.507059e+37
    %v258 = vand.u32 %v246, 2147483648
    %v259 = vor.u32 1.1754944e-38, %v258
    %v260 = vsel %vm257, %v259, %v255
    %v261 = vmul.f32 1.0, %v260
    %v262 = vsub.f32 %v242, %v161
    %v263 = vmul.f32 %v261, %v262
    %v264 = vadd.f32 %v161, %v263
    %265 = vst [vmem:[#allocation8] sm:$0xff] %v264
    // Predicated region
    $region26: #{tpu_custom_call.1} parent=1 // pred_check
      _
    $region27: #{tpu_custom_call.1} parent=1 // pred_check_branch
      %267 = sbr.rel (0) target = $region29
    $region28: #{tpu_custom_call.1} parent=1 // pred_region
      %269 = vsyncadd [#allocation4], 0
      %s271 = sshll.u32 [#allocation8], 4
      %s272 = int_to_ptr.vmem [resolvable:$true] %s271
      %s273 = sshll.u32 %s3, 4
      %s274 = int_to_ptr.hbm [resolvable:$true] %s273
      %276 = dma.vmem_to_hbm [thread:$0]  %s272, 128, %s274, [#allocation4]
    $region29: #{tpu_custom_call.1} parent=1 // pred_fallthru
      _
    // Predicated region
    $region30: #{tpu_custom_call.1} parent=1 // pred_check
      _
    $region31: #{tpu_custom_call.1} parent=1 // pred_check_branch
      %278 = sbr.rel (0) target = $region33
    $region32: #{tpu_custom_call.1} parent=1 // pred_region
      %280 = dma.done [#allocation4], 128
    $region33: #{tpu_custom_call.1} parent=1 // pred_fallthru
      _
    %281 = vsyncpa [#allocation3], 1
    %282 = vsyncpa [#allocation6], 1
    %283 = vsyncpa [#allocation4], 1

</llo_original>
